<compile_context>
chip_gen: v7x
topology: tpu7x:2x2x1
jax: 0.10.0
libtpu: 0.0.40
codegen_flags: <defaults>
</compile_context>

<pallas_src>
import jax
import jax.numpy as jnp
from jax.experimental import pallas as pl
from jax.experimental.pallas import tpu as pltpu


def _make_kernel(B, C_out, activation, eps=1e-5):
    def kernel(cole_ref, colo_ref, we_ref, wo_ref, wg_ref, bg_ref,
               gamma_ref, beta_ref, out_ref):
        # cole_ref / colo_ref : (B, KK, HW)   im2col slabs, spatial on lanes
        # we_ref / wo_ref     : (C_out, KK)   conv weights (K order = C_in, fy, fx)
        # wg_ref              : (C_out, C_out) shared 1x1 conv_e weight
        # bg_ref              : (C_out, 1)    conv_e bias
        # gamma_ref/beta_ref  : (C_out, 1)    GroupNorm(1, C) affine
        # out_ref             : (B, 2*C_out, HW)  [even_l ; odd_l] along channels
        we = we_ref[...]
        wo = wo_ref[...]
        wg = wg_ref[...]
        bg = bg_ref[...]
        gamma = gamma_ref[...]
        beta = beta_ref[...]

        def inorm_act(y):
            # y: (C_out, HW) f32.  InstanceNorm2d(affine=False): per-channel
            # stats over the spatial (lane) axis.  Conv bias omitted -> cancelled.
            mu = jnp.mean(y, axis=1, keepdims=True)
            yc = y - mu
            var = jnp.mean(yc * yc, axis=1, keepdims=True)
            y = yc * jax.lax.rsqrt(var + eps)
            if activation == "relu":
                y = jnp.maximum(y, 0.0)
            elif activation == "lrelu":
                y = jnp.where(y >= 0.0, y, 0.2 * y)
            elif activation == "tanh":
                y = jnp.tanh(y)
            # activation == "none": identity
            return y

        def gate(feat):
            # feat: (C_out, HW) f32.  sigmoid(GroupNorm(1,C)(conv_e(feat))).
            z = jnp.dot(wg, feat.astype(wg.dtype),
                        preferred_element_type=jnp.float32) + bg
            mu = jnp.mean(z, keepdims=True)          # single group: stats over (C, HW)
            zc = z - mu
            var = jnp.mean(zc * zc, keepdims=True)
            zn = zc * jax.lax.rsqrt(var + eps)
            zn = zn * gamma + beta
            return jax.nn.sigmoid(zn)

        for b in range(B):  # B is a small static constant
            xe = inorm_act(jnp.dot(we, cole_ref[b],
                                   preferred_element_type=jnp.float32))
            xo = inorm_act(jnp.dot(wo, colo_ref[b],
                                   preferred_element_type=jnp.float32))
            # shared conv_e / norm_e / sig_e for both gates (as in PyTorch forward)
            out_ref[b, :C_out, :] = (xe * (1.0 + gate(xo))).astype(out_ref.dtype)
            out_ref[b, C_out:, :] = (xo * (1.0 + gate(xe))).astype(out_ref.dtype)

    return kernel


def split_block4_forward(x, params, f_size=3, activation="relu",
                         matmul_dtype=jnp.float32, max_samples_per_step=8):
    """x: (N, C_in, H, W) NCHW.  Returns (N, 2*o_ch, H//2, W//2) NCHW.

    matmul_dtype: set to jnp.bfloat16 on v6e/v7x for native MXU throughput
    (accumulation and the norm/sigmoid epilogue stay f32 either way).
    """
    N, C_in, H, W = x.shape
    assert H % 2 == 0 and W % 2 == 0
    assert f_size % 2 == 1, "f_size must be odd for 'same' conv_block padding"
    H2, W2 = H // 2, W // 2
    p = (f_size - 1) // 2
    C_out = params["we"].shape[0]
    KK = f_size * f_size * C_in
    HW = H2 * W2

    # Samples per grid step: largest divisor of N <= max_samples_per_step,
    # preferring a grid of >= 2 steps so both v7x TensorCores get work.
    divs = [b for b in range(1, min(N, max_samples_per_step) + 1) if N % b == 0]
    cands = [b for b in divs if N // b >= 2]
    B = max(cands) if cands else max(divs)

    # --- layout prep (fused XLA pass): split, zero-pad, im2col, K-major ------
    def prep(xi):  # xi: (N, C_in, H2, W2)
        xp = jnp.pad(xi, ((0, 0), (0, 0), (p, p), (p, p)))
        cols = [xp[:, :, dy:dy + H2, dx:dx + W2]
                for dy in range(f_size) for dx in range(f_size)]
        col = jnp.stack(cols, axis=2)                        # (N, C_in, f*f, H2, W2)
        return col.reshape(N, KK, HW).astype(matmul_dtype)   # K order = (C_in, fy, fx)

    cole = prep(x[:, :, 0::2, 0::2])
    colo = prep(x[:, :, 1::2, 1::2])

    # torch weight (C_out, C_in, f, f) -> (C_out, KK), same K order as im2col.
    we = params["we"].reshape(C_out, KK).astype(matmul_dtype)
    wo = params["wo"].reshape(C_out, KK).astype(matmul_dtype)
    wg = params["wg"][:, :, 0, 0].astype(matmul_dtype)        # (C_out, C_out): wg @ feat
    bg = params["bg"].reshape(C_out, 1).astype(jnp.float32)
    gamma = params["gn_gamma"].reshape(C_out, 1).astype(jnp.float32)
    beta = params["gn_beta"].reshape(C_out, 1).astype(jnp.float32)
    # be / bo intentionally NOT passed: InstanceNorm cancels a per-channel bias.

    kernel = _make_kernel(B, C_out, activation)

    itemsize = jnp.dtype(matmul_dtype).itemsize
    per_step = (2 * 2 * B * KK * HW * itemsize            # cole/colo double-buffered
                + 2 * B * 2 * C_out * HW * 4              # output double-buffered
                + (2 * C_out * KK + C_out * C_out) * itemsize + 3 * C_out * 4)
    vmem_limit = int(min(64 << 20, max(32 << 20, 6 * per_step)))

    # Weight / bias / norm-param specs are grid-invariant (constant index_map),
    # so they stay VMEM-resident across all grid steps.
    out_flat = pl.pallas_call(
        kernel,
        out_shape=jax.ShapeDtypeStruct((N, 2 * C_out, HW), x.dtype),
        grid_spec=pltpu.PrefetchScalarGridSpec(
            num_scalar_prefetch=0,
            grid=(N // B,),
            in_specs=[
                pl.BlockSpec((B, KK, HW), lambda i: (i, 0, 0)),     # cole
                pl.BlockSpec((B, KK, HW), lambda i: (i, 0, 0)),     # colo
                pl.BlockSpec((C_out, KK), lambda i: (0, 0)),        # we
                pl.BlockSpec((C_out, KK), lambda i: (0, 0)),        # wo
                pl.BlockSpec((C_out, C_out), lambda i: (0, 0)),     # wg (conv_e)
                pl.BlockSpec((C_out, 1), lambda i: (0, 0)),         # bg
                pl.BlockSpec((C_out, 1), lambda i: (0, 0)),         # GN gamma
                pl.BlockSpec((C_out, 1), lambda i: (0, 0)),         # GN beta
            ],
            out_specs=pl.BlockSpec((B, 2 * C_out, HW), lambda i: (i, 0, 0)),
        ),
        compiler_params=pltpu.CompilerParams(
            dimension_semantics=("parallel",),
            vmem_limit_bytes=vmem_limit),
    )(cole, colo, we, wo, wg, bg, gamma, beta)

    # (N, 2*C_out, H2*W2) is already channel-major -> plain reshape to NCHW.
    return out_flat.reshape(N, 2 * C_out, H2, W2)


def init_params(key, in_ch, o_ch, f_size):
    ks = jax.random.split(key, 8)
    bound = 1.0 / jnp.sqrt(in_ch * f_size * f_size)
    we = jax.random.uniform(ks[0], (o_ch, in_ch, f_size, f_size), jnp.float32, -bound, bound)
    be = jax.random.uniform(ks[1], (o_ch,), jnp.float32, -bound, bound)
    wo = jax.random.uniform(ks[2], (o_ch, in_ch, f_size, f_size), jnp.float32, -bound, bound)
    bo = jax.random.uniform(ks[3], (o_ch,), jnp.float32, -bound, bound)
    bound_g = 1.0 / jnp.sqrt(o_ch)
    wg = jax.random.uniform(ks[4], (o_ch, o_ch, 1, 1), jnp.float32, -bound_g, bound_g)
    bg = jax.random.uniform(ks[5], (o_ch,), jnp.float32, -bound_g, bound_g)
    gn_gamma = 1.0 + 0.1 * jax.random.normal(ks[6], (o_ch,), jnp.float32)
    gn_beta = 0.1 * jax.random.normal(ks[7], (o_ch,), jnp.float32)
    # conv_o / norm_o / sig_o exist in the PyTorch module but are never used in
    # its forward(); no parameters are created for them.
    return dict(we=we, be=be, wo=wo, bo=bo, wg=wg, bg=bg,
                gn_gamma=gn_gamma, gn_beta=gn_beta)


def _reference(x, params, f_size=3, activation="relu", eps=1e-5):
    """Pure-JAX reference matching the PyTorch Split_block4.forward (with biases)."""
    p = (f_size - 1) // 2
    xe_i = x[:, :, 0::2, 0::2]
    xo_i = x[:, :, 1::2, 1::2]

    def act(y):
        if activation == "relu":
            return jnp.maximum(y, 0.0)
        if activation == "lrelu":
            return jnp.where(y >= 0.0, y, 0.2 * y)
        if activation == "tanh":
            return jnp.tanh(y)
        return y

    def conv_block_fwd(xi, w, b):
        y = jax.lax.conv_general_dilated(
            xi, w, window_strides=(1, 1), padding=[(p, p), (p, p)],
            dimension_numbers=("NCHW", "OIHW", "NCHW"))
        y = y + b[None, :, None, None]
        mu = jnp.mean(y, axis=(2, 3), keepdims=True)        # InstanceNorm2d
        var = jnp.var(y, axis=(2, 3), keepdims=True)
        y = (y - mu) / jnp.sqrt(var + eps)
        return act(y)

    x_even = conv_block_fwd(xe_i, params["we"], params["be"])
    x_odd = conv_block_fwd(xo_i, params["wo"], params["bo"])

    def gate(src):
        z = jax.lax.conv_general_dilated(
            src, params["wg"], (1, 1), "VALID",
            dimension_numbers=("NCHW", "OIHW", "NCHW"))
        z = z + params["bg"][None, :, None, None]
        mu = jnp.mean(z, axis=(1, 2, 3), keepdims=True)      # GroupNorm(1, C)
        var = jnp.var(z, axis=(1, 2, 3), keepdims=True)
        z = (z - mu) / jnp.sqrt(var + eps)
        z = z * params["gn_gamma"][None, :, None, None] + params["gn_beta"][None, :, None, None]
        return jax.nn.sigmoid(z)

    x_even_l = x_even + x_even * gate(x_odd)
    x_odd_l = x_odd + x_odd * gate(x_even)
    return jnp.concatenate([x_even_l, x_odd_l], axis=1)


if __name__ == "__main__":
    key = jax.random.PRNGKey(0)
    N, C_in, o_ch, H, W, f_size = 2, 4, 8, 16, 16, 3

    kx, kp = jax.random.split(key)
    x = jax.random.normal(kx, (N, C_in, H, W), jnp.float32)       # NCHW
    params = init_params(kp, C_in, o_ch, f_size)

    out = split_block4_forward(x, params, f_size=f_size, activation="relu")
    out = jax.block_until_ready(out)

    ref = _reference(x, params, f_size=f_size, activation="relu")
    assert out.shape == (N, 2 * o_ch, H // 2, W // 2)
    max_err = float(jnp.max(jnp.abs(out - ref)))
    assert jnp.allclose(out, ref, atol=1e-4, rtol=1e-4), max_err

    print("KERNEL_OK")
</pallas_src>

<mosaic_0001>
module attributes {stable_mosaic.version = 11 : i64} {
  func.func @kernel(%arg0: i32, %arg1: memref<1x36x64xf32, #tpu.memory_space<vmem>>, %arg2: memref<1x36x64xf32, #tpu.memory_space<vmem>>, %arg3: memref<8x36xf32, #tpu.memory_space<vmem>>, %arg4: memref<8x36xf32, #tpu.memory_space<vmem>>, %arg5: memref<8x8xf32, #tpu.memory_space<vmem>>, %arg6: memref<8x1xf32, #tpu.memory_space<vmem>>, %arg7: memref<8x1xf32, #tpu.memory_space<vmem>>, %arg8: memref<8x1xf32, #tpu.memory_space<vmem>>, %arg9: memref<1x16x64xf32, #tpu.memory_space<vmem>>) attributes {dimension_semantics = [#tpu.dimension_semantics<parallel>], iteration_bounds = array<i64: 2>, scalar_prefetch = 0 : i64, scratch_operands = 0 : i64, tpu.core_type = #tpu.core_type<tc>, window_params = [{transform_indices = @transform_0, window_bounds = array<i64: 1, 36, 64>}, {transform_indices = @transform_1, window_bounds = array<i64: 1, 36, 64>}, {pipeline_mode = #tpu.pipeline_mode<synchronous>, transform_indices = @transform_2, window_bounds = array<i64: 8, 36>}, {pipeline_mode = #tpu.pipeline_mode<synchronous>, transform_indices = @transform_3, window_bounds = array<i64: 8, 36>}, {pipeline_mode = #tpu.pipeline_mode<synchronous>, transform_indices = @transform_4, window_bounds = array<i64: 8, 8>}, {pipeline_mode = #tpu.pipeline_mode<synchronous>, transform_indices = @transform_5, window_bounds = array<i64: 8, 1>}, {pipeline_mode = #tpu.pipeline_mode<synchronous>, transform_indices = @transform_6, window_bounds = array<i64: 8, 1>}, {pipeline_mode = #tpu.pipeline_mode<synchronous>, transform_indices = @transform_7, window_bounds = array<i64: 8, 1>}, {transform_indices = @transform_8, window_bounds = array<i64: 1, 16, 64>}]} {
    %c0 = arith.constant 0 : index
    %c0_0 = arith.constant 0 : index
    %0 = vector.load %arg3[%c0, %c0_0] : memref<8x36xf32, #tpu.memory_space<vmem>>, vector<8x36xf32>
    %c0_1 = arith.constant 0 : index
    %c0_2 = arith.constant 0 : index
    %1 = vector.load %arg4[%c0_1, %c0_2] : memref<8x36xf32, #tpu.memory_space<vmem>>, vector<8x36xf32>
    %c0_3 = arith.constant 0 : index
    %c0_4 = arith.constant 0 : index
    %2 = vector.load %arg5[%c0_3, %c0_4] : memref<8x8xf32, #tpu.memory_space<vmem>>, vector<8x8xf32>
    %c0_5 = arith.constant 0 : index
    %c0_6 = arith.constant 0 : index
    %3 = vector.load %arg6[%c0_5, %c0_6] : memref<8x1xf32, #tpu.memory_space<vmem>>, vector<8x1xf32>
    %c0_7 = arith.constant 0 : index
    %c0_8 = arith.constant 0 : index
    %4 = vector.load %arg7[%c0_7, %c0_8] : memref<8x1xf32, #tpu.memory_space<vmem>>, vector<8x1xf32>
    %c0_9 = arith.constant 0 : index
    %c0_10 = arith.constant 0 : index
    %5 = vector.load %arg8[%c0_9, %c0_10] : memref<8x1xf32, #tpu.memory_space<vmem>>, vector<8x1xf32>
    %c0_11 = arith.constant 0 : index
    %c0_12 = arith.constant 0 : index
    %c0_13 = arith.constant 0 : index
    %6 = vector.load %arg1[%c0_11, %c0_12, %c0_13] : memref<1x36x64xf32, #tpu.memory_space<vmem>>, vector<1x36x64xf32>
    %7 = vector.shape_cast %6 : vector<1x36x64xf32> to vector<36x64xf32>
    %cst = arith.constant dense<0.000000e+00> : vector<8x64xf32>
    %8 = tpu.matmul %0, %7, %cst {dimension_numbers = #tpu.dot_dimension_numbers<[1], [0], [0], [1], [0, 0, 1, 1], [], []>} : vector<8x36xf32>, vector<36x64xf32>, vector<8x64xf32> -> vector<8x64xf32>
    %cst_14 = arith.constant dense<0.000000e+00> : vector<8xf32>
    %9 = vector.multi_reduction <add>, %8, %cst_14 [1] : vector<8x64xf32> to vector<8xf32>
    %10 = vector.shape_cast %9 : vector<8xf32> to vector<8x1xf32>
    %cst_15 = arith.constant 6.400000e+01 : f32
    %11 = vector.broadcast %cst_15 : f32 to vector<8x1xf32>
    %12 = arith.divf %10, %11 : vector<8x1xf32>
    %13 = vector.broadcast %12 : vector<8x1xf32> to vector<8x64xf32>
    %14 = arith.subf %8, %13 : vector<8x64xf32>
    %15 = arith.mulf %14, %14 : vector<8x64xf32>
    %cst_16 = arith.constant dense<0.000000e+00> : vector<8xf32>
    %16 = vector.multi_reduction <add>, %15, %cst_16 [1] : vector<8x64xf32> to vector<8xf32>
    %17 = vector.shape_cast %16 : vector<8xf32> to vector<8x1xf32>
    %cst_17 = arith.constant 6.400000e+01 : f32
    %18 = vector.broadcast %cst_17 : f32 to vector<8x1xf32>
    %19 = arith.divf %17, %18 : vector<8x1xf32>
    %cst_18 = arith.constant 9.99999974E-6 : f32
    %20 = vector.broadcast %cst_18 : f32 to vector<8x1xf32>
    %21 = arith.addf %19, %20 : vector<8x1xf32>
    %22 = math.rsqrt %21 : vector<8x1xf32>
    %23 = vector.broadcast %22 : vector<8x1xf32> to vector<8x64xf32>
    %24 = arith.mulf %14, %23 : vector<8x64xf32>
    %cst_19 = arith.constant 0.000000e+00 : f32
    %25 = vector.broadcast %cst_19 : f32 to vector<8x64xf32>
    %26 = arith.maximumf %24, %25 : vector<8x64xf32>
    %c0_20 = arith.constant 0 : index
    %c0_21 = arith.constant 0 : index
    %c0_22 = arith.constant 0 : index
    %27 = vector.load %arg2[%c0_20, %c0_21, %c0_22] : memref<1x36x64xf32, #tpu.memory_space<vmem>>, vector<1x36x64xf32>
    %28 = vector.shape_cast %27 : vector<1x36x64xf32> to vector<36x64xf32>
    %cst_23 = arith.constant dense<0.000000e+00> : vector<8x64xf32>
    %29 = tpu.matmul %1, %28, %cst_23 {dimension_numbers = #tpu.dot_dimension_numbers<[1], [0], [0], [1], [0, 0, 1, 1], [], []>} : vector<8x36xf32>, vector<36x64xf32>, vector<8x64xf32> -> vector<8x64xf32>
    %cst_24 = arith.constant dense<0.000000e+00> : vector<8xf32>
    %30 = vector.multi_reduction <add>, %29, %cst_24 [1] : vector<8x64xf32> to vector<8xf32>
    %31 = vector.shape_cast %30 : vector<8xf32> to vector<8x1xf32>
    %cst_25 = arith.constant 6.400000e+01 : f32
    %32 = vector.broadcast %cst_25 : f32 to vector<8x1xf32>
    %33 = arith.divf %31, %32 : vector<8x1xf32>
    %34 = vector.broadcast %33 : vector<8x1xf32> to vector<8x64xf32>
    %35 = arith.subf %29, %34 : vector<8x64xf32>
    %36 = arith.mulf %35, %35 : vector<8x64xf32>
    %cst_26 = arith.constant dense<0.000000e+00> : vector<8xf32>
    %37 = vector.multi_reduction <add>, %36, %cst_26 [1] : vector<8x64xf32> to vector<8xf32>
    %38 = vector.shape_cast %37 : vector<8xf32> to vector<8x1xf32>
    %cst_27 = arith.constant 6.400000e+01 : f32
    %39 = vector.broadcast %cst_27 : f32 to vector<8x1xf32>
    %40 = arith.divf %38, %39 : vector<8x1xf32>
    %cst_28 = arith.constant 9.99999974E-6 : f32
    %41 = vector.broadcast %cst_28 : f32 to vector<8x1xf32>
    %42 = arith.addf %40, %41 : vector<8x1xf32>
    %43 = math.rsqrt %42 : vector<8x1xf32>
    %44 = vector.broadcast %43 : vector<8x1xf32> to vector<8x64xf32>
    %45 = arith.mulf %35, %44 : vector<8x64xf32>
    %cst_29 = arith.constant 0.000000e+00 : f32
    %46 = vector.broadcast %cst_29 : f32 to vector<8x64xf32>
    %47 = arith.maximumf %45, %46 : vector<8x64xf32>
    %cst_30 = arith.constant dense<0.000000e+00> : vector<8x64xf32>
    %48 = tpu.matmul %2, %47, %cst_30 {dimension_numbers = #tpu.dot_dimension_numbers<[1], [0], [0], [1], [0, 0, 1, 1], [], []>} : vector<8x8xf32>, vector<8x64xf32>, vector<8x64xf32> -> vector<8x64xf32>
    %49 = vector.broadcast %3 : vector<8x1xf32> to vector<8x64xf32>
    %50 = arith.addf %48, %49 : vector<8x64xf32>
    %51 = vector.shape_cast %50 : vector<8x64xf32> to vector<1x8x64xf32>
    %cst_31 = arith.constant dense<0.000000e+00> : vector<1xf32>
    %52 = vector.multi_reduction <add>, %51, %cst_31 [1, 2] : vector<1x8x64xf32> to vector<1xf32>
    %53 = vector.shape_cast %52 : vector<1xf32> to vector<1x1x1xf32>
    %54 = vector.extract %53[0, 0, 0] : f32 from vector<1x1x1xf32>
    %55 = vector.broadcast %54 : f32 to vector<1x1xf32>
    %cst_32 = arith.constant 5.120000e+02 : f32
    %56 = vector.broadcast %cst_32 : f32 to vector<1x1xf32>
    %57 = arith.divf %55, %56 : vector<1x1xf32>
    %58 = vector.broadcast %57 : vector<1x1xf32> to vector<8x64xf32>
    %59 = arith.subf %50, %58 : vector<8x64xf32>
    %60 = arith.mulf %59, %59 : vector<8x64xf32>
    %61 = vector.shape_cast %60 : vector<8x64xf32> to vector<1x8x64xf32>
    %cst_33 = arith.constant dense<0.000000e+00> : vector<1xf32>
    %62 = vector.multi_reduction <add>, %61, %cst_33 [1, 2] : vector<1x8x64xf32> to vector<1xf32>
    %63 = vector.shape_cast %62 : vector<1xf32> to vector<1x1x1xf32>
    %64 = vector.extract %63[0, 0, 0] : f32 from vector<1x1x1xf32>
    %65 = vector.broadcast %64 : f32 to vector<1x1xf32>
    %cst_34 = arith.constant 5.120000e+02 : f32
    %66 = vector.broadcast %cst_34 : f32 to vector<1x1xf32>
    %67 = arith.divf %65, %66 : vector<1x1xf32>
    %cst_35 = arith.constant 9.99999974E-6 : f32
    %68 = vector.broadcast %cst_35 : f32 to vector<1x1xf32>
    %69 = arith.addf %67, %68 : vector<1x1xf32>
    %70 = math.rsqrt %69 : vector<1x1xf32>
    %71 = vector.broadcast %70 : vector<1x1xf32> to vector<8x64xf32>
    %72 = arith.mulf %59, %71 : vector<8x64xf32>
    %73 = vector.broadcast %4 : vector<8x1xf32> to vector<8x64xf32>
    %74 = arith.mulf %72, %73 : vector<8x64xf32>
    %75 = vector.broadcast %5 : vector<8x1xf32> to vector<8x64xf32>
    %76 = arith.addf %74, %75 : vector<8x64xf32>
    %77 = arith.negf %76 : vector<8x64xf32>
    %78 = math.exp %77 : vector<8x64xf32>
    %cst_36 = arith.constant 1.000000e+00 : f32
    %79 = vector.broadcast %cst_36 : f32 to vector<8x64xf32>
    %80 = arith.addf %79, %78 : vector<8x64xf32>
    %81 = arith.divf %79, %80 : vector<8x64xf32>
    %cst_37 = arith.constant 1.000000e+00 : f32
    %82 = vector.broadcast %cst_37 : f32 to vector<8x64xf32>
    %83 = arith.addf %82, %81 : vector<8x64xf32>
    %84 = arith.mulf %26, %83 : vector<8x64xf32>
    %c0_38 = arith.constant 0 : index
    %c0_39 = arith.constant 0 : index
    %c0_40 = arith.constant 0 : index
    %85 = vector.load %arg9[%c0_38, %c0_39, %c0_40] : memref<1x16x64xf32, #tpu.memory_space<vmem>>, vector<1x8x64xf32>
    %86 = vector.shape_cast %85 : vector<1x8x64xf32> to vector<8x64xf32>
    %87 = vector.shape_cast %84 : vector<8x64xf32> to vector<1x8x64xf32>
    tpu.vector_store %arg9[%c0_38, %c0_39, %c0_40], %87 {strides = array<i32>} : memref<1x16x64xf32, #tpu.memory_space<vmem>>, vector<1x8x64xf32>,
    %cst_41 = arith.constant dense<0.000000e+00> : vector<8x64xf32>
    %88 = tpu.matmul %2, %26, %cst_41 {dimension_numbers = #tpu.dot_dimension_numbers<[1], [0], [0], [1], [0, 0, 1, 1], [], []>} : vector<8x8xf32>, vector<8x64xf32>, vector<8x64xf32> -> vector<8x64xf32>
    %89 = vector.broadcast %3 : vector<8x1xf32> to vector<8x64xf32>
    %90 = arith.addf %88, %89 : vector<8x64xf32>
    %91 = vector.shape_cast %90 : vector<8x64xf32> to vector<1x8x64xf32>
    %cst_42 = arith.constant dense<0.000000e+00> : vector<1xf32>
    %92 = vector.multi_reduction <add>, %91, %cst_42 [1, 2] : vector<1x8x64xf32> to vector<1xf32>
    %93 = vector.shape_cast %92 : vector<1xf32> to vector<1x1x1xf32>
    %94 = vector.extract %93[0, 0, 0] : f32 from vector<1x1x1xf32>
    %95 = vector.broadcast %94 : f32 to vector<1x1xf32>
    %cst_43 = arith.constant 5.120000e+02 : f32
    %96 = vector.broadcast %cst_43 : f32 to vector<1x1xf32>
    %97 = arith.divf %95, %96 : vector<1x1xf32>
    %98 = vector.broadcast %97 : vector<1x1xf32> to vector<8x64xf32>
    %99 = arith.subf %90, %98 : vector<8x64xf32>
    %100 = arith.mulf %99, %99 : vector<8x64xf32>
    %101 = vector.shape_cast %100 : vector<8x64xf32> to vector<1x8x64xf32>
    %cst_44 = arith.constant dense<0.000000e+00> : vector<1xf32>
    %102 = vector.multi_reduction <add>, %101, %cst_44 [1, 2] : vector<1x8x64xf32> to vector<1xf32>
    %103 = vector.shape_cast %102 : vector<1xf32> to vector<1x1x1xf32>
    %104 = vector.extract %103[0, 0, 0] : f32 from vector<1x1x1xf32>
    %105 = vector.broadcast %104 : f32 to vector<1x1xf32>
    %cst_45 = arith.constant 5.120000e+02 : f32
    %106 = vector.broadcast %cst_45 : f32 to vector<1x1xf32>
    %107 = arith.divf %105, %106 : vector<1x1xf32>
    %cst_46 = arith.constant 9.99999974E-6 : f32
    %108 = vector.broadcast %cst_46 : f32 to vector<1x1xf32>
    %109 = arith.addf %107, %108 : vector<1x1xf32>
    %110 = math.rsqrt %109 : vector<1x1xf32>
    %111 = vector.broadcast %110 : vector<1x1xf32> to vector<8x64xf32>
    %112 = arith.mulf %99, %111 : vector<8x64xf32>
    %113 = vector.broadcast %4 : vector<8x1xf32> to vector<8x64xf32>
    %114 = arith.mulf %112, %113 : vector<8x64xf32>
    %115 = vector.broadcast %5 : vector<8x1xf32> to vector<8x64xf32>
    %116 = arith.addf %114, %115 : vector<8x64xf32>
    %117 = arith.negf %116 : vector<8x64xf32>
    %118 = math.exp %117 : vector<8x64xf32>
    %cst_47 = arith.constant 1.000000e+00 : f32
    %119 = vector.broadcast %cst_47 : f32 to vector<8x64xf32>
    %120 = arith.addf %119, %118 : vector<8x64xf32>
    %121 = arith.divf %119, %120 : vector<8x64xf32>
    %cst_48 = arith.constant 1.000000e+00 : f32
    %122 = vector.broadcast %cst_48 : f32 to vector<8x64xf32>
    %123 = arith.addf %122, %121 : vector<8x64xf32>
    %124 = arith.mulf %47, %123 : vector<8x64xf32>
    %c0_49 = arith.constant 0 : index
    %c8 = arith.constant 8 : index
    %c0_50 = arith.constant 0 : index
    %125 = vector.load %arg9[%c0_49, %c8, %c0_50] : memref<1x16x64xf32, #tpu.memory_space<vmem>>, vector<1x8x64xf32>
    %126 = vector.shape_cast %125 : vector<1x8x64xf32> to vector<8x64xf32>
    %127 = vector.shape_cast %124 : vector<8x64xf32> to vector<1x8x64xf32>
    tpu.vector_store %arg9[%c0_49, %c8, %c0_50], %127 {strides = array<i32>} : memref<1x16x64xf32, #tpu.memory_space<vmem>>, vector<1x8x64xf32>,
    return
  }
  func.func @transform_0(%arg0: i32) -> (i32, i32, i32) {
    %c0_i32 = arith.constant 0 : i32
    %c0_i32_0 = arith.constant 0 : i32
    %c0_i32_1 = arith.constant 0 : i32
    return %arg0, %c0_i32, %c0_i32_0 : i32, i32, i32
  }
  func.func @transform_1(%arg0: i32) -> (i32, i32, i32) {
    %c0_i32 = arith.constant 0 : i32
    %c0_i32_0 = arith.constant 0 : i32
    %c0_i32_1 = arith.constant 0 : i32
    return %arg0, %c0_i32, %c0_i32_0 : i32, i32, i32
  }
  func.func @transform_2(%arg0: i32) -> (i32, i32) {
    %c0_i32 = arith.constant 0 : i32
    %c0_i32_0 = arith.constant 0 : i32
    %c0_i32_1 = arith.constant 0 : i32
    return %c0_i32, %c0_i32_0 : i32, i32
  }
  func.func @transform_3(%arg0: i32) -> (i32, i32) {
    %c0_i32 = arith.constant 0 : i32
    %c0_i32_0 = arith.constant 0 : i32
    %c0_i32_1 = arith.constant 0 : i32
    return %c0_i32, %c0_i32_0 : i32, i32
  }
  func.func @transform_4(%arg0: i32) -> (i32, i32) {
    %c0_i32 = arith.constant 0 : i32
    %c0_i32_0 = arith.constant 0 : i32
    %c0_i32_1 = arith.constant 0 : i32
    return %c0_i32, %c0_i32_0 : i32, i32
  }
  func.func @transform_5(%arg0: i32) -> (i32, i32) {
    %c0_i32 = arith.constant 0 : i32
    %c0_i32_0 = arith.constant 0 : i32
    %c0_i32_1 = arith.constant 0 : i32
    return %c0_i32, %c0_i32_0 : i32, i32
  }
  func.func @transform_6(%arg0: i32) -> (i32, i32) {
    %c0_i32 = arith.constant 0 : i32
    %c0_i32_0 = arith.constant 0 : i32
    %c0_i32_1 = arith.constant 0 : i32
    return %c0_i32, %c0_i32_0 : i32, i32
  }
  func.func @transform_7(%arg0: i32) -> (i32, i32) {
    %c0_i32 = arith.constant 0 : i32
    %c0_i32_0 = arith.constant 0 : i32
    %c0_i32_1 = arith.constant 0 : i32
    return %c0_i32, %c0_i32_0 : i32, i32
  }
  func.func @transform_8(%arg0: i32) -> (i32, i32, i32) {
    %c0_i32 = arith.constant 0 : i32
    %c0_i32_0 = arith.constant 0 : i32
    %c0_i32_1 = arith.constant 0 : i32
    return %arg0, %c0_i32, %c0_i32_0 : i32, i32, i32
  }
}

</mosaic_0001>

<llo_original>
// kernel: tpu_custom_call.1
$region0: #{tpu_custom_call.1}
  #allocation0 [shape = 'u32[]', space=smem, size = 0x4, offset = 0x4, fixed_abs, tag = 'smem constant byte address 0x4 - core index']
  #allocation1 [shape = 'u32[144,128]{1,0:T(1,128)}', space=vmem, size = 0x12000, scoped, tag = 'internal scratch']
  %s0 = inlined_call_operand.vmem [shape: f32[2,36,64], index: 0, kind: input, shape index: {}]
  %s1 = inlined_call_operand.vmem [shape: f32[2,36,64], index: 1, kind: input, shape index: {}]
  %s2 = inlined_call_operand.vmem [shape: f32[8,36], index: 2, kind: input, shape index: {}]
  %s3 = inlined_call_operand.vmem [shape: f32[8,36], index: 3, kind: input, shape index: {}]
  %s4 = inlined_call_operand.vmem [shape: f32[8,8], index: 4, kind: input, shape index: {}]
  %s5 = inlined_call_operand.vmem [shape: f32[8,1], index: 5, kind: input, shape index: {}]
  %s6 = inlined_call_operand.vmem [shape: f32[8,1], index: 6, kind: input, shape index: {}]
  %s7 = inlined_call_operand.vmem [shape: f32[8,1], index: 7, kind: input, shape index: {}]
  %s8 = inlined_call_operand.hbm [shape: f32[2,16,64], index: 8, kind: output, shape index: {}]
  %s9 = sld [smem:[#allocation0]]
  $region65: #{tpu_custom_call.1} parent=0
    _
  %s11 = ssub.s32 1, %s9
  %s12 = scalar_select 0, %s11, %s9
  $region1: #{tpu_custom_call.1} parent=0
    #allocation2 [shape = 'u8[16384]{0}', space=vmem, size = 0x4000, scoped, tag = 'output window, operand 0']
    #allocation3 [shape = 's32[2]{0}', space=sflag, size = 0x8, scoped, tag = 'scoped memory for tpu_custom_call.1']
    %13 = vsyncpa [#allocation3], 0
    %s14 = scalar_lea.sflag [#allocation3], 1
    %15 = vsyncpa %s14, 0
    loop: start=0, step=1, limit=4
    $region2: #{tpu_custom_call.1} parent=1 // loop_pre_header
      _
    $region3: #{tpu_custom_call.1} parent=1 // loop_header
      %s17 = sphi 0, %s21
      %p18 = scmp.ge.s32.totalorder %s17, 4
      %s27 = sphi 0, %s29
      %s30 = sphi 0, %s27
      %s31 = sphi 0, %s30
      %s47 = sphi 0, %s31
      %s53 = sphi 0, %s55
      %s56 = sphi 0, %s53
      %s57 = sphi 0, %s56
      %s73 = sphi 0, %s57
      %s77 = sphi 0, %s77
      %s79 = sphi 0, %s77
      %s80 = sphi 0, %s79
      %s94 = sphi 0, %s80
      %s98 = sphi 0, %s98
      %s100 = sphi 0, %s98
      %s101 = sphi 0, %s100
      %s115 = sphi 0, %s101
      %s119 = sphi 0, %s119
      %s121 = sphi 0, %s119
      %s122 = sphi 0, %s121
      %s136 = sphi 0, %s122
      %s140 = sphi 0, %s140
      %s142 = sphi 0, %s140
      %s143 = sphi 0, %s142
      %s157 = sphi 0, %s143
      %s161 = sphi 0, %s161
      %s163 = sphi 0, %s161
      %s164 = sphi 0, %s163
      %s178 = sphi 0, %s164
      %s182 = sphi 0, %s182
      %s184 = sphi 0, %s182
      %s185 = sphi 0, %s184
      %s199 = sphi 0, %s185
      %s205 = sphi 0, %s207
      %s208 = sphi 0, %s205
      %s209 = sphi 0, %s208
      %s225 = sphi 0, %s209
    $region4: #{tpu_custom_call.1} parent=1 // loop_header_branch
      %20 = sbr.rel (%p18) target = $region8
    $region5: #{tpu_custom_call.1} parent=1 // loop_body
      %s22 = ssub.s32 %s17, 1
      %s23 = ssub.s32 %s17, 2
      %s24 = sadd.s32 %s17, 1
      %s25 = ssub.s32 %s17, %s24
      %p26 = scmp.eq.s32.totalorder %s25, 0
      %s28 = sadd.s32 %s27, 1
      %s29 = scalar_select %p26, %s27, %s28
      %p32 = pneg %p26
      %p33 = scmp.eq.s32.totalorder %s17, 1
      %p34 = por %p32, %p33
      %p35 = scmp.ne.s32.totalorder %s27, %s30
      %p36 = scmp.eq.s32.totalorder %s17, 0
      %p37 = por %p35, %p36
      %p38 = scmp.ne.s32.totalorder %s27, %s30
      %p39 = scmp.eq.s32.totalorder %s22, 1
      %p40 = por %p38, %p39
      %p41 = scmp.ne.s32.totalorder %s30, %s31
      %p42 = scmp.eq.s32.totalorder %s22, 0
      %p43 = por %p41, %p42
      %p44 = scmp.ne.s32.totalorder %s30, %s31
      %p45 = scmp.eq.s32.totalorder %s23, 1
      %p46 = por %p44, %p45
      %p48 = scmp.ne.s32.totalorder %s31, %s47
      %p49 = scmp.eq.s32.totalorder %s23, 0
      %p50 = por %p48, %p49
      %s51 = ssub.s32 %s17, %s24
      %p52 = scmp.eq.s32.totalorder %s51, 0
      %s54 = sadd.s32 %s53, 1
      %s55 = scalar_select %p52, %s53, %s54
      %p58 = pneg %p52
      %p59 = scmp.eq.s32.totalorder %s17, 1
      %p60 = por %p58, %p59
      %p61 = scmp.ne.s32.totalorder %s53, %s56
      %p62 = scmp.eq.s32.totalorder %s17, 0
      %p63 = por %p61, %p62
      %p64 = scmp.ne.s32.totalorder %s53, %s56
      %p65 = scmp.eq.s32.totalorder %s22, 1
      %p66 = por %p64, %p65
      %p67 = scmp.ne.s32.totalorder %s56, %s57
      %p68 = scmp.eq.s32.totalorder %s22, 0
      %p69 = por %p67, %p68
      %p70 = scmp.ne.s32.totalorder %s56, %s57
      %p71 = scmp.eq.s32.totalorder %s23, 1
      %p72 = por %p70, %p71
      %p74 = scmp.ne.s32.totalorder %s57, %s73
      %p75 = scmp.eq.s32.totalorder %s23, 0
      %p76 = por %p74, %p75
      %s78 = sadd.s32 %s77, 1
      %p81 = scmp.eq.s32.totalorder %s17, 1
      %p82 = scmp.ne.s32.totalorder %s77, %s79
      %p83 = scmp.eq.s32.totalorder %s17, 0
      %p84 = por %p82, %p83
      %p85 = scmp.ne.s32.totalorder %s77, %s79
      %p86 = scmp.eq.s32.totalorder %s22, 1
      %p87 = por %p85, %p86
      %p88 = scmp.ne.s32.totalorder %s79, %s80
      %p89 = scmp.eq.s32.totalorder %s22, 0
      %p90 = por %p88, %p89
      %p91 = scmp.ne.s32.totalorder %s79, %s80
      %p92 = scmp.eq.s32.totalorder %s23, 1
      %p93 = por %p91, %p92
      %p95 = scmp.ne.s32.totalorder %s80, %s94
      %p96 = scmp.eq.s32.totalorder %s23, 0
      %p97 = por %p95, %p96
      %s99 = sadd.s32 %s98, 1
      %p102 = scmp.eq.s32.totalorder %s17, 1
      %p103 = scmp.ne.s32.totalorder %s98, %s100
      %p104 = scmp.eq.s32.totalorder %s17, 0
      %p105 = por %p103, %p104
      %p106 = scmp.ne.s32.totalorder %s98, %s100
      %p107 = scmp.eq.s32.totalorder %s22, 1
      %p108 = por %p106, %p107
      %p109 = scmp.ne.s32.totalorder %s100, %s101
      %p110 = scmp.eq.s32.totalorder %s22, 0
      %p111 = por %p109, %p110
      %p112 = scmp.ne.s32.totalorder %s100, %s101
      %p113 = scmp.eq.s32.totalorder %s23, 1
      %p114 = por %p112, %p113
      %p116 = scmp.ne.s32.totalorder %s101, %s115
      %p117 = scmp.eq.s32.totalorder %s23, 0
      %p118 = por %p116, %p117
      %s120 = sadd.s32 %s119, 1
      %p123 = scmp.eq.s32.totalorder %s17, 1
      %p124 = scmp.ne.s32.totalorder %s119, %s121
      %p125 = scmp.eq.s32.totalorder %s17, 0
      %p126 = por %p124, %p125
      %p127 = scmp.ne.s32.totalorder %s119, %s121
      %p128 = scmp.eq.s32.totalorder %s22, 1
      %p129 = por %p127, %p128
      %p130 = scmp.ne.s32.totalorder %s121, %s122
      %p131 = scmp.eq.s32.totalorder %s22, 0
      %p132 = por %p130, %p131
      %p133 = scmp.ne.s32.totalorder %s121, %s122
      %p134 = scmp.eq.s32.totalorder %s23, 1
      %p135 = por %p133, %p134
      %p137 = scmp.ne.s32.totalorder %s122, %s136
      %p138 = scmp.eq.s32.totalorder %s23, 0
      %p139 = por %p137, %p138
      %s141 = sadd.s32 %s140, 1
      %p144 = scmp.eq.s32.totalorder %s17, 1
      %p145 = scmp.ne.s32.totalorder %s140, %s142
      %p146 = scmp.eq.s32.totalorder %s17, 0
      %p147 = por %p145, %p146
      %p148 = scmp.ne.s32.totalorder %s140, %s142
      %p149 = scmp.eq.s32.totalorder %s22, 1
      %p150 = por %p148, %p149
      %p151 = scmp.ne.s32.totalorder %s142, %s143
      %p152 = scmp.eq.s32.totalorder %s22, 0
      %p153 = por %p151, %p152
      %p154 = scmp.ne.s32.totalorder %s142, %s143
      %p155 = scmp.eq.s32.totalorder %s23, 1
      %p156 = por %p154, %p155
      %p158 = scmp.ne.s32.totalorder %s143, %s157
      %p159 = scmp.eq.s32.totalorder %s23, 0
      %p160 = por %p158, %p159
      %s162 = sadd.s32 %s161, 1
      %p165 = scmp.eq.s32.totalorder %s17, 1
      %p166 = scmp.ne.s32.totalorder %s161, %s163
      %p167 = scmp.eq.s32.totalorder %s17, 0
      %p168 = por %p166, %p167
      %p169 = scmp.ne.s32.totalorder %s161, %s163
      %p170 = scmp.eq.s32.totalorder %s22, 1
      %p171 = por %p169, %p170
      %p172 = scmp.ne.s32.totalorder %s163, %s164
      %p173 = scmp.eq.s32.totalorder %s22, 0
      %p174 = por %p172, %p173
      %p175 = scmp.ne.s32.totalorder %s163, %s164
      %p176 = scmp.eq.s32.totalorder %s23, 1
      %p177 = por %p175, %p176
      %p179 = scmp.ne.s32.totalorder %s164, %s178
      %p180 = scmp.eq.s32.totalorder %s23, 0
      %p181 = por %p179, %p180
      %s183 = sadd.s32 %s182, 1
      %p186 = scmp.eq.s32.totalorder %s17, 1
      %p187 = scmp.ne.s32.totalorder %s182, %s184
      %p188 = scmp.eq.s32.totalorder %s17, 0
      %p189 = por %p187, %p188
      %p190 = scmp.ne.s32.totalorder %s182, %s184
      %p191 = scmp.eq.s32.totalorder %s22, 1
      %p192 = por %p190, %p191
      %p193 = scmp.ne.s32.totalorder %s184, %s185
      %p194 = scmp.eq.s32.totalorder %s22, 0
      %p195 = por %p193, %p194
      %p196 = scmp.ne.s32.totalorder %s184, %s185
      %p197 = scmp.eq.s32.totalorder %s23, 1
      %p198 = por %p196, %p197
      %p200 = scmp.ne.s32.totalorder %s185, %s199
      %p201 = scmp.eq.s32.totalorder %s23, 0
      %p202 = por %p200, %p201
      %s203 = ssub.s32 %s17, %s24
      %p204 = scmp.eq.s32.totalorder %s203, 0
      %s206 = sadd.s32 %s205, 1
      %s207 = scalar_select %p204, %s205, %s206
      %p210 = pneg %p204
      %p211 = scmp.eq.s32.totalorder %s17, 1
      %p212 = por %p210, %p211
      %p213 = scmp.ne.s32.totalorder %s205, %s208
      %p214 = scmp.eq.s32.totalorder %s17, 0
      %p215 = por %p213, %p214
      %p216 = scmp.ne.s32.totalorder %s205, %s208
      %p217 = scmp.eq.s32.totalorder %s22, 1
      %p218 = por %p216, %p217
      %p219 = scmp.ne.s32.totalorder %s208, %s209
      %p220 = scmp.eq.s32.totalorder %s22, 0
      %p221 = por %p219, %p220
      %p222 = scmp.ne.s32.totalorder %s208, %s209
      %p223 = scmp.eq.s32.totalorder %s23, 1
      %p224 = por %p222, %p223
      %p226 = scmp.ne.s32.totalorder %s209, %s225
      %p227 = scmp.eq.s32.totalorder %s23, 0
      %p228 = por %p226, %p227
      %p229 = scmp.le.s32.totalorder 1, %s17
      %p230 = scmp.lt.s32.totalorder %s17, 3
      %p231 = pnand %p229, %p230
      %p232 = pneg %p231
      // Predicated region
      $region9: #{tpu_custom_call.1} parent=5 // pred_check
        _
      $region10: #{tpu_custom_call.1} parent=5 // pred_check_branch
        %234 = sbr.rel (%p231) target = $region12
      $region11: #{tpu_custom_call.1} parent=5 // pred_region
        %s235 = ssub.s32 %s17, 1
        // Predicated region
        $region13: #{tpu_custom_call.1} parent=11 // pred_check
          %p236 = pneg %p90
        $region14: #{tpu_custom_call.1} parent=11 // pred_check_branch
          %238 = sbr.rel (%p236) target = $region16
        $region15: #{tpu_custom_call.1} parent=11 // pred_region
          _
        $region16: #{tpu_custom_call.1} parent=11 // pred_fallthru
          _
        // Predicated region
        $region17: #{tpu_custom_call.1} parent=11 // pred_check
          %p239 = pneg %p111
        $region18: #{tpu_custom_call.1} parent=11 // pred_check_branch
          %241 = sbr.rel (%p239) target = $region20
        $region19: #{tpu_custom_call.1} parent=11 // pred_region
          _
        $region20: #{tpu_custom_call.1} parent=11 // pred_fallthru
          _
        // Predicated region
        $region21: #{tpu_custom_call.1} parent=11 // pred_check
          %p242 = pneg %p132
        $region22: #{tpu_custom_call.1} parent=11 // pred_check_branch
          %244 = sbr.rel (%p242) target = $region24
        $region23: #{tpu_custom_call.1} parent=11 // pred_region
          _
        $region24: #{tpu_custom_call.1} parent=11 // pred_fallthru
          _
        // Predicated region
        $region25: #{tpu_custom_call.1} parent=11 // pred_check
          %p245 = pneg %p153
        $region26: #{tpu_custom_call.1} parent=11 // pred_check_branch
          %247 = sbr.rel (%p245) target = $region28
        $region27: #{tpu_custom_call.1} parent=11 // pred_region
          _
        $region28: #{tpu_custom_call.1} parent=11 // pred_fallthru
          _
        // Predicated region
        $region29: #{tpu_custom_call.1} parent=11 // pred_check
          %p248 = pneg %p174
        $region30: #{tpu_custom_call.1} parent=11 // pred_check_branch
          %250 = sbr.rel (%p248) target = $region32
        $region31: #{tpu_custom_call.1} parent=11 // pred_region
          _
        $region32: #{tpu_custom_call.1} parent=11 // pred_fallthru
          _
        // Predicated region
        $region33: #{tpu_custom_call.1} parent=11 // pred_check
          %p251 = pneg %p195
        $region34: #{tpu_custom_call.1} parent=11 // pred_check_branch
          %253 = sbr.rel (%p251) target = $region36
        $region35: #{tpu_custom_call.1} parent=11 // pred_region
          _
        $region36: #{tpu_custom_call.1} parent=11 // pred_fallthru
          _
      $region12: #{tpu_custom_call.1} parent=5 // pred_fallthru
        _
      %p254 = scmp.lt.s32.totalorder %s17, 2
      // Predicated region
      $region37: #{tpu_custom_call.1} parent=5 // pred_check
        %p255 = pneg %p254
      $region38: #{tpu_custom_call.1} parent=5 // pred_check_branch
        %257 = sbr.rel (%p255) target = $region40
      $region39: #{tpu_custom_call.1} parent=5 // pred_region
        // Predicated region
        $region41: #{tpu_custom_call.1} parent=39 // pred_check
          %p258 = pneg %p37
        $region42: #{tpu_custom_call.1} parent=39 // pred_check_branch
          %260 = sbr.rel (%p258) target = $region44
        $region43: #{tpu_custom_call.1} parent=39 // pred_region
          %p261 = scmp.lt.s32.totalorder %s17, 1
          %s262 = scalar_select %p261, %s17, 1
          %s263 = smul.addr %s262, 5
          %s264 = smul.addr %s263, 8
          %s265 = scalar_lea.vmem %s0, %s264
        $region44: #{tpu_custom_call.1} parent=39 // pred_fallthru
          _
        // Predicated region
        $region45: #{tpu_custom_call.1} parent=39 // pred_check
          %p266 = pneg %p63
        $region46: #{tpu_custom_call.1} parent=39 // pred_check_branch
          %268 = sbr.rel (%p266) target = $region48
        $region47: #{tpu_custom_call.1} parent=39 // pred_region
          %p269 = scmp.lt.s32.totalorder %s17, 1
          %s270 = scalar_select %p269, %s17, 1
          %s271 = smul.addr %s270, 5
          %s272 = smul.addr %s271, 8
          %s273 = scalar_lea.vmem %s1, %s272
        $region48: #{tpu_custom_call.1} parent=39 // pred_fallthru
          _
      $region40: #{tpu_custom_call.1} parent=5 // pred_fallthru
        _
      %p274 = scmp.le.s32.totalorder 1, %s17
      %p275 = scmp.lt.s32.totalorder %s17, 3
      %p276 = pnand %p274, %p275
      %p277 = pneg %p276
      // Predicated region
      $region49: #{tpu_custom_call.1} parent=5 // pred_check
        _
      $region50: #{tpu_custom_call.1} parent=5 // pred_check_branch
        %279 = sbr.rel (%p276) target = $region52
      $region51: #{tpu_custom_call.1} parent=5 // pred_region
        %s280 = ssub.s32 %s17, 1
        %p281 = scmp.lt.s32.totalorder %s22, 1
        %s282 = scalar_select %p281, %s22, 1
        %s283 = smul.addr %s282, 5
        %s284 = smul.addr %s283, 8
        %s285 = scalar_lea.vmem %s0, %s284
        %p286 = pneg %p43
        %p287 = pneg %p40
        %p288 = scmp.lt.s32.totalorder %s22, 1
        %s289 = scalar_select %p288, %s22, 1
        %s290 = smul.addr %s289, 5
        %s291 = smul.addr %s290, 8
        %s292 = scalar_lea.vmem %s1, %s291
        %p293 = pneg %p69
        %p294 = pneg %p66
        %p295 = pneg %p90
        %p296 = pneg %p87
        %p297 = pneg %p111
        %p298 = pneg %p108
        %p299 = pneg %p132
        %p300 = pneg %p129
        %p301 = pneg %p153
        %p302 = pneg %p150
        %p303 = pneg %p174
        %p304 = pneg %p171
        %p305 = pneg %p195
        %p306 = pneg %p192
        %p307 = pneg %p221
        %p308 = pneg %p218
        %s309 = sand.u32 %s208, 1
        %s310 = scalar_lea.sflag [#allocation3], %s309
        %s311 = sand.u32 %s208, 1
        %s312 = smul.addr %s311, 16
        %s313 = scalar_lea.vmem [#allocation2], %s312
        %p314 = scmp.lt.s32.totalorder %s22, 1
        %s315 = scalar_select %p314, %s22, 1
        %s316 = smul.addr %s315, 5
        %s317 = smul.addr %s316, 8
        %s318 = scalar_lea.vmem %s0, %s317
        %p319 = scmp.lt.s32.totalorder %s22, 1
        %s320 = scalar_select %p319, %s22, 1
        %s321 = smul.addr %s320, 5
        %s322 = smul.addr %s321, 8
        %s323 = scalar_lea.vmem %s1, %s322
        %v324 = vld [vmem:[%s2] sm:$0xff]
        %v325 = vld [vmem:[%s3] sm:$0xff]
        %v326 = vld [vmem:[%s4] sm:$0xff]
        %v327 = vld [vmem:[%s5] sm:$0xff]
        %v328 = vld [vmem:[%s6] sm:$0xff]
        %v329 = vld [vmem:[%s7] sm:$0xff]
        %v330 = vld [vmem:[%s318] sm:$0xff]
        %v331 = vld [vmem:[%s318 + $0x8] sm:$0xff]
        %v332 = vld [vmem:[%s318 + $0x10] sm:$0xff]
        %v333 = vld [vmem:[%s318 + $0x18] sm:$0xff]
        %v334 = vld [vmem:[%s318 + $0x20] sm:$0xf]
        %vm335 = vcmask 293888
        %v337 = vsel %vm335, %v324, 0
        %vm339 = vcmask 1043456
        %v341 = vsel %vm339, %v334, 0
        %343 = vmatprep.subr.mxu0 0.0
        %344 = vmatpush1.msra.mxu0 %v330
        %345 = vmatprep.subr.mxu0 0.0
        %346 = vmatpush1.msra.mxu0 %v331
        %347 = vmatprep.subr.mxu0 0.0
        %348 = vmatpush1.msra.mxu0 %v332
        %349 = vmatprep.subr.mxu0 0.0
        %350 = vmatpush1.msra.mxu0 %v333
        %351 = vmatprep.subr.mxu0 0.0
        %352 = vmatpush1.msra.mxu0 %v341
        %353 = vmatprep.subr.mxu0 0.0
        %354 = vmatpush1.msra.mxu0 0.0
        %355 = vmatprep.subr.mxu0 0.0
        %356 = vmatpush1.msra.mxu0 0.0
        %357 = vmatprep.subr.mxu0 0.0
        %358 = vmatpush1.msra.mxu0 0.0
        %359 = vmatprep.subr.mxu0 0.0
        %360 = vmatpush1.msra.mxu0 0.0
        %361 = vmatprep.subr.mxu0 0.0
        %362 = vmatpush1.msra.mxu0 0.0
        %363 = vmatprep.subr.mxu0 0.0
        %364 = vmatpush1.msra.mxu0 0.0
        %365 = vmatprep.subr.mxu0 0.0
        %366 = vmatpush1.msra.mxu0 0.0
        %367 = vmatprep.subr.mxu0 0.0
        %368 = vmatpush1.msra.mxu0 0.0
        %369 = vmatprep.subr.mxu0 0.0
        %370 = vmatpush1.msra.mxu0 0.0
        %371 = vmatprep.subr.mxu0 0.0
        %372 = vmatpush1.msra.mxu0 0.0
        %373 = vmatprep.subr.mxu0 0.0
        %374 = vmatpush1.msra.mxu0 0.0
        %375 = vmatprep.subr.mxu0 0.0
        %376 = vmatpush1.msra.mxu0 0.0
        %377 = vmatprep.subr.mxu0 0.0
        %378 = vmatpush1.msra.mxu0 0.0
        %379 = vmatprep.subr.mxu0 0.0
        %380 = vmatpush1.msra.mxu0 0.0
        %381 = vmatprep.subr.mxu0 0.0
        %382 = vmatpush1.msra.mxu0 0.0
        %383 = vmatprep.subr.mxu0 0.0
        %384 = vmatpush1.msra.mxu0 0.0
        %385 = vmatprep.subr.mxu0 0.0
        %386 = vmatpush1.msra.mxu0 0.0
        %387 = vmatprep.subr.mxu0 0.0
        %388 = vmatpush1.msra.mxu0 0.0
        %389 = vmatprep.subr.mxu0 0.0
        %390 = vmatpush1.msra.mxu0 0.0
        %391 = vmatprep.subr.mxu0 0.0
        %392 = vmatpush1.msra.mxu0 0.0
        %393 = vmatprep.subr.mxu0 0.0
        %394 = vmatpush1.msra.mxu0 0.0
        %395 = vmatprep.subr.mxu0 0.0
        %396 = vmatpush1.msra.mxu0 0.0
        %397 = vmatprep.subr.mxu0 0.0
        %398 = vmatpush1.msra.mxu0 0.0
        %399 = vmatprep.subr.mxu0 0.0
        %400 = vmatpush1.msra.mxu0 0.0
        %401 = vmatprep.subr.mxu0 0.0
        %402 = vmatpush1.msra.mxu0 0.0
        %403 = vmatprep.subr.mxu0 0.0
        %404 = vmatpush1.msra.mxu0 0.0
        %405 = vmatprep.subr.mxu0 0.0
        %406 = vmatpush1.msra.mxu0 0.0
        %407 = vmatprep.mubr.f32.mxu0 0.0
        %408 = vmatmul.mubr.f32.gmra.mrb[0].mxu0 %v337
        %v409 = vpop.f32.mrb[0].mxu0
        %v410 = vadd.f32 0.0, %v409
        %v411 = vpop.f32.mrb[0].mxu0
        %412 = vdwg.mxu0
        %vm413 = vcmask 523264
        %v414 = vsel %vm413, %v410, 0.0
        %415 = vadd.xlane.f32.xlu0 %v414
        %v416 = vpop.xlane.xlu0 %415
        %v417 = vrcp.pop 64.0
        %v418 = vmul.f32 %v416, %v417
        %v419 = vsub.f32 %v410, %v418
        %v420 = vmul.f32 %v419, %v419
        %v421 = vsel %vm413, %v420, 0.0
        %422 = vadd.xlane.f32.xlu0 %v421
        %v423 = vpop.xlane.xlu0 %422
        %v424 = vmul.f32 %v423, %v417
        %v425 = vadd.f32 %v424, 1e-05
        %v426 = vrsqrt.pop %v425
        %v427 = vmul.f32 %v419, %v426
        %v428 = vmax.f32 %v427, 0.0
        %v429 = vld [vmem:[%s323] sm:$0xff]
        %v430 = vld [vmem:[%s323 + $0x8] sm:$0xff]
        %v431 = vld [vmem:[%s323 + $0x10] sm:$0xff]
        %v432 = vld [vmem:[%s323 + $0x18] sm:$0xff]
        %v433 = vld [vmem:[%s323 + $0x20] sm:$0xf]
        %v435 = vsel %vm335, %v325, 0
        %v438 = vsel %vm339, %v433, 0
        %440 = vmatprep.subr.mxu0 0.0
        %441 = vmatpush1.msra.mxu0 %v429
        %442 = vmatprep.subr.mxu0 0.0
        %443 = vmatpush1.msra.mxu0 %v430
        %444 = vmatprep.subr.mxu0 0.0
        %445 = vmatpush1.msra.mxu0 %v431
        %446 = vmatprep.subr.mxu0 0.0
        %447 = vmatpush1.msra.mxu0 %v432
        %448 = vmatprep.subr.mxu0 0.0
        %449 = vmatpush1.msra.mxu0 %v438
        %450 = vmatprep.subr.mxu0 0.0
        %451 = vmatpush1.msra.mxu0 0.0
        %452 = vmatprep.subr.mxu0 0.0
        %453 = vmatpush1.msra.mxu0 0.0
        %454 = vmatprep.subr.mxu0 0.0
        %455 = vmatpush1.msra.mxu0 0.0
        %456 = vmatprep.subr.mxu0 0.0
        %457 = vmatpush1.msra.mxu0 0.0
        %458 = vmatprep.subr.mxu0 0.0
        %459 = vmatpush1.msra.mxu0 0.0
        %460 = vmatprep.subr.mxu0 0.0
        %461 = vmatpush1.msra.mxu0 0.0
        %462 = vmatprep.subr.mxu0 0.0
        %463 = vmatpush1.msra.mxu0 0.0
        %464 = vmatprep.subr.mxu0 0.0
        %465 = vmatpush1.msra.mxu0 0.0
        %466 = vmatprep.subr.mxu0 0.0
        %467 = vmatpush1.msra.mxu0 0.0
        %468 = vmatprep.subr.mxu0 0.0
        %469 = vmatpush1.msra.mxu0 0.0
        %470 = vmatprep.subr.mxu0 0.0
        %471 = vmatpush1.msra.mxu0 0.0
        %472 = vmatprep.subr.mxu0 0.0
        %473 = vmatpush1.msra.mxu0 0.0
        %474 = vmatprep.subr.mxu0 0.0
        %475 = vmatpush1.msra.mxu0 0.0
        %476 = vmatprep.subr.mxu0 0.0
        %477 = vmatpush1.msra.mxu0 0.0
        %478 = vmatprep.subr.mxu0 0.0
        %479 = vmatpush1.msra.mxu0 0.0
        %480 = vmatprep.subr.mxu0 0.0
        %481 = vmatpush1.msra.mxu0 0.0
        %482 = vmatprep.subr.mxu0 0.0
        %483 = vmatpush1.msra.mxu0 0.0
        %484 = vmatprep.subr.mxu0 0.0
        %485 = vmatpush1.msra.mxu0 0.0
        %486 = vmatprep.subr.mxu0 0.0
        %487 = vmatpush1.msra.mxu0 0.0
        %488 = vmatprep.subr.mxu0 0.0
        %489 = vmatpush1.msra.mxu0 0.0
        %490 = vmatprep.subr.mxu0 0.0
        %491 = vmatpush1.msra.mxu0 0.0
        %492 = vmatprep.subr.mxu0 0.0
        %493 = vmatpush1.msra.mxu0 0.0
        %494 = vmatprep.subr.mxu0 0.0
        %495 = vmatpush1.msra.mxu0 0.0
        %496 = vmatprep.subr.mxu0 0.0
        %497 = vmatpush1.msra.mxu0 0.0
        %498 = vmatprep.subr.mxu0 0.0
        %499 = vmatpush1.msra.mxu0 0.0
        %500 = vmatprep.subr.mxu0 0.0
        %501 = vmatpush1.msra.mxu0 0.0
        %502 = vmatprep.subr.mxu0 0.0
        %503 = vmatpush1.msra.mxu0 0.0
        %504 = vmatprep.mubr.f32.mxu0 0.0
        %505 = vmatmul.mubr.f32.gmra.mrb[0].mxu0 %v435
        %v506 = vpop.f32.mrb[0].mxu0
        %v507 = vadd.f32 0.0, %v506
        %v508 = vpop.f32.mrb[0].mxu0
        %509 = vdwg.mxu0
        %v510 = vsel %vm413, %v507, 0.0
        %511 = vadd.xlane.f32.xlu0 %v510
        %v512 = vpop.xlane.xlu0 %511
        %v513 = vmul.f32 %v512, %v417
        %v514 = vsub.f32 %v507, %v513
        %v515 = vmul.f32 %v514, %v514
        %v516 = vsel %vm413, %v515, 0.0
        %517 = vadd.xlane.f32.xlu0 %v516
        %v518 = vpop.xlane.xlu0 %517
        %v519 = vmul.f32 %v518, %v417
        %v520 = vadd.f32 %v519, 1e-05
        %v521 = vrsqrt.pop %v520
        %v522 = vmul.f32 %v514, %v521
        %v523 = vmax.f32 %v522, 0.0
        %525 = vset.pattern.permute.xlu0 0
        %526 = vperm.xlu0 %525, %v327
        %v527 = vpop.permute.xlu0 %526
        %vm529 = vcmask 64512
        %v531 = vsel %vm529, %v326, 0
        %533 = vmatprep.subr.mxu0 0.0
        %534 = vmatpush1.msra.mxu0 %v523
        %535 = vmatprep.subr.mxu0 0.0
        %536 = vmatpush1.msra.mxu0 0.0
        %537 = vmatprep.subr.mxu0 0.0
        %538 = vmatpush1.msra.mxu0 0.0
        %539 = vmatprep.subr.mxu0 0.0
        %540 = vmatpush1.msra.mxu0 0.0
        %541 = vmatprep.subr.mxu0 0.0
        %542 = vmatpush1.msra.mxu0 0.0
        %543 = vmatprep.subr.mxu0 0.0
        %544 = vmatpush1.msra.mxu0 0.0
        %545 = vmatprep.subr.mxu0 0.0
        %546 = vmatpush1.msra.mxu0 0.0
        %547 = vmatprep.subr.mxu0 0.0
        %548 = vmatpush1.msra.mxu0 0.0
        %549 = vmatprep.subr.mxu0 0.0
        %550 = vmatpush1.msra.mxu0 0.0
        %551 = vmatprep.subr.mxu0 0.0
        %552 = vmatpush1.msra.mxu0 0.0
        %553 = vmatprep.subr.mxu0 0.0
        %554 = vmatpush1.msra.mxu0 0.0
        %555 = vmatprep.subr.mxu0 0.0
        %556 = vmatpush1.msra.mxu0 0.0
        %557 = vmatprep.subr.mxu0 0.0
        %558 = vmatpush1.msra.mxu0 0.0
        %559 = vmatprep.subr.mxu0 0.0
        %560 = vmatpush1.msra.mxu0 0.0
        %561 = vmatprep.subr.mxu0 0.0
        %562 = vmatpush1.msra.mxu0 0.0
        %563 = vmatprep.subr.mxu0 0.0
        %564 = vmatpush1.msra.mxu0 0.0
        %565 = vmatprep.subr.mxu0 0.0
        %566 = vmatpush1.msra.mxu0 0.0
        %567 = vmatprep.subr.mxu0 0.0
        %568 = vmatpush1.msra.mxu0 0.0
        %569 = vmatprep.subr.mxu0 0.0
        %570 = vmatpush1.msra.mxu0 0.0
        %571 = vmatprep.subr.mxu0 0.0
        %572 = vmatpush1.msra.mxu0 0.0
        %573 = vmatprep.subr.mxu0 0.0
        %574 = vmatpush1.msra.mxu0 0.0
        %575 = vmatprep.subr.mxu0 0.0
        %576 = vmatpush1.msra.mxu0 0.0
        %577 = vmatprep.subr.mxu0 0.0
        %578 = vmatpush1.msra.mxu0 0.0
        %579 = vmatprep.subr.mxu0 0.0
        %580 = vmatpush1.msra.mxu0 0.0
        %581 = vmatprep.subr.mxu0 0.0
        %582 = vmatpush1.msra.mxu0 0.0
        %583 = vmatprep.subr.mxu0 0.0
        %584 = vmatpush1.msra.mxu0 0.0
        %585 = vmatprep.subr.mxu0 0.0
        %586 = vmatpush1.msra.mxu0 0.0
        %587 = vmatprep.subr.mxu0 0.0
        %588 = vmatpush1.msra.mxu0 0.0
        %589 = vmatprep.subr.mxu0 0.0
        %590 = vmatpush1.msra.mxu0 0.0
        %591 = vmatprep.subr.mxu0 0.0
        %592 = vmatpush1.msra.mxu0 0.0
        %593 = vmatprep.subr.mxu0 0.0
        %594 = vmatpush1.msra.mxu0 0.0
        %595 = vmatprep.subr.mxu0 0.0
        %596 = vmatpush1.msra.mxu0 0.0
        %597 = vmatprep.mubr.f32.mxu0 0.0
        %598 = vmatmul.mubr.f32.gmra.mrb[0].mxu0 %v531
        %v599 = vpop.f32.mrb[0].mxu0
        %v600 = vadd.f32 %v527, %v599
        %v601 = vpop.f32.mrb[0].mxu0
        %602 = vdwg.mxu0
        %v603 = vsel %vm413, %v600, 0.0
        %604 = vadd.xlane.f32.xlu0 %v603
        %v605 = vpop.xlane.xlu0 %604
        %v606 = vrot.slane %v605, 4
        %v607 = vadd.f32 %v605, %v606
        %v608 = vrot.slane %v607, 2
        %v609 = vadd.f32 %v607, %v608
        %v610 = vrot.slane %v609, 1
        %v611 = vadd.f32 %v609, %v610
        %s612 = vtos %v611
        %v613 = vstv %s612
        %v614 = vrcp.pop 512.0
        %v615 = vmul.f32 %v613, %v614
        %v616 = vsub.f32 %v600, %v615
        %v617 = vmul.f32 %v616, %v616
        %v618 = vsel %vm413, %v617, 0.0
        %619 = vadd.xlane.f32.xlu0 %v618
        %v620 = vpop.xlane.xlu0 %619
        %v621 = vrot.slane %v620, 4
        %v622 = vadd.f32 %v620, %v621
        %v623 = vrot.slane %v622, 2
        %v624 = vadd.f32 %v622, %v623
        %v625 = vrot.slane %v624, 1
        %v626 = vadd.f32 %v624, %v625
        %s627 = vtos %v626
        %v628 = vstv %s627
        %v629 = vmul.f32 %v628, %v614
        %v630 = vadd.f32 %v629, 1e-05
        %v631 = vrsqrt.pop %v630
        %v632 = vmul.f32 %v616, %v631
        %634 = vset.pattern.permute.xlu0 0
        %635 = vperm.xlu0 %634, %v328
        %v636 = vpop.permute.xlu0 %635
        %v638 = vmul.f32 %v632, %v636
        %640 = vset.pattern.permute.xlu0 0
        %641 = vperm.xlu0 %640, %v329
        %v642 = vpop.permute.xlu0 %641
        %v644 = vadd.f32 %v638, %v642
        %v645 = vxor.u32 %v644, 2147483648
        %v646 = vmul.f32 %v645, 1.442695
        %v647 = vpow.pop %v646
        %v648 = vadd.f32 %v647, 1.0
        %v649 = vrcp.pop %v648
        %v650 = vmul.f32 1.0, %v649
        %v651 = vadd.f32 %v650, 1.0
        %v652 = vmul.f32 %v428, %v651
        %653 = vst.msk [vmem:[%s313] sm:$0xff] %vm413, %v652
        %654 = vmatprep.subr.mxu0 0.0
        %655 = vmatpush1.msra.mxu0 %v428
        %656 = vmatprep.subr.mxu0 0.0
        %657 = vmatpush1.msra.mxu0 0.0
        %658 = vmatprep.subr.mxu0 0.0
        %659 = vmatpush1.msra.mxu0 0.0
        %660 = vmatprep.subr.mxu0 0.0
        %661 = vmatpush1.msra.mxu0 0.0
        %662 = vmatprep.subr.mxu0 0.0
        %663 = vmatpush1.msra.mxu0 0.0
        %664 = vmatprep.subr.mxu0 0.0
        %665 = vmatpush1.msra.mxu0 0.0
        %666 = vmatprep.subr.mxu0 0.0
        %667 = vmatpush1.msra.mxu0 0.0
        %668 = vmatprep.subr.mxu0 0.0
        %669 = vmatpush1.msra.mxu0 0.0
        %670 = vmatprep.subr.mxu0 0.0
        %671 = vmatpush1.msra.mxu0 0.0
        %672 = vmatprep.subr.mxu0 0.0
        %673 = vmatpush1.msra.mxu0 0.0
        %674 = vmatprep.subr.mxu0 0.0
        %675 = vmatpush1.msra.mxu0 0.0
        %676 = vmatprep.subr.mxu0 0.0
        %677 = vmatpush1.msra.mxu0 0.0
        %678 = vmatprep.subr.mxu0 0.0
        %679 = vmatpush1.msra.mxu0 0.0
        %680 = vmatprep.subr.mxu0 0.0
        %681 = vmatpush1.msra.mxu0 0.0
        %682 = vmatprep.subr.mxu0 0.0
        %683 = vmatpush1.msra.mxu0 0.0
        %684 = vmatprep.subr.mxu0 0.0
        %685 = vmatpush1.msra.mxu0 0.0
        %686 = vmatprep.subr.mxu0 0.0
        %687 = vmatpush1.msra.mxu0 0.0
        %688 = vmatprep.subr.mxu0 0.0
        %689 = vmatpush1.msra.mxu0 0.0
        %690 = vmatprep.subr.mxu0 0.0
        %691 = vmatpush1.msra.mxu0 0.0
        %692 = vmatprep.subr.mxu0 0.0
        %693 = vmatpush1.msra.mxu0 0.0
        %694 = vmatprep.subr.mxu0 0.0
        %695 = vmatpush1.msra.mxu0 0.0
        %696 = vmatprep.subr.mxu0 0.0
        %697 = vmatpush1.msra.mxu0 0.0
        %698 = vmatprep.subr.mxu0 0.0
        %699 = vmatpush1.msra.mxu0 0.0
        %700 = vmatprep.subr.mxu0 0.0
        %701 = vmatpush1.msra.mxu0 0.0
        %702 = vmatprep.subr.mxu0 0.0
        %703 = vmatpush1.msra.mxu0 0.0
        %704 = vmatprep.subr.mxu0 0.0
        %705 = vmatpush1.msra.mxu0 0.0
        %706 = vmatprep.subr.mxu0 0.0
        %707 = vmatpush1.msra.mxu0 0.0
        %708 = vmatprep.subr.mxu0 0.0
        %709 = vmatpush1.msra.mxu0 0.0
        %710 = vmatprep.subr.mxu0 0.0
        %711 = vmatpush1.msra.mxu0 0.0
        %712 = vmatprep.subr.mxu0 0.0
        %713 = vmatpush1.msra.mxu0 0.0
        %714 = vmatprep.subr.mxu0 0.0
        %715 = vmatpush1.msra.mxu0 0.0
        %716 = vmatprep.subr.mxu0 0.0
        %717 = vmatpush1.msra.mxu0 0.0
        %718 = vmatprep.mubr.f32.mxu0 0.0
        %719 = vmatmul.mubr.f32.gmra.mrb[0].mxu0 %v531
        %v720 = vpop.f32.mrb[0].mxu0
        %v721 = vadd.f32 %v527, %v720
        %v722 = vpop.f32.mrb[0].mxu0
        %723 = vdwg.mxu0
        %v724 = vsel %vm413, %v721, 0.0
        %725 = vadd.xlane.f32.xlu0 %v724
        %v726 = vpop.xlane.xlu0 %725
        %v727 = vrot.slane %v726, 4
        %v728 = vadd.f32 %v726, %v727
        %v729 = vrot.slane %v728, 2
        %v730 = vadd.f32 %v728, %v729
        %v731 = vrot.slane %v730, 1
        %v732 = vadd.f32 %v730, %v731
        %s733 = vtos %v732
        %v734 = vstv %s733
        %v735 = vmul.f32 %v734, %v614
        %v736 = vsub.f32 %v721, %v735
        %v737 = vmul.f32 %v736, %v736
        %v738 = vsel %vm413, %v737, 0.0
        %739 = vadd.xlane.f32.xlu0 %v738
        %v740 = vpop.xlane.xlu0 %739
        %v741 = vrot.slane %v740, 4
        %v742 = vadd.f32 %v740, %v741
        %v743 = vrot.slane %v742, 2
        %v744 = vadd.f32 %v742, %v743
        %v745 = vrot.slane %v744, 1
        %v746 = vadd.f32 %v744, %v745
        %s747 = vtos %v746
        %v748 = vstv %s747
        %v749 = vmul.f32 %v748, %v614
        %v750 = vadd.f32 %v749, 1e-05
        %v751 = vrsqrt.pop %v750
        %v752 = vmul.f32 %v736, %v751
        %v753 = vmul.f32 %v752, %v636
        %v754 = vadd.f32 %v753, %v642
        %v755 = vxor.u32 %v754, 2147483648
        %v756 = vmul.f32 %v755, 1.442695
        %v757 = vpow.pop %v756
        %v758 = vadd.f32 %v757, 1.0
        %v759 = vrcp.pop %v758
        %v760 = vmul.f32 1.0, %v759
        %v761 = vadd.f32 %v760, 1.0
        %v762 = vmul.f32 %v523, %v761
        %763 = vst.msk [vmem:[%s313 + $0x8] sm:$0xff] %vm413, %v762
        %s764 = sand.u32 %s208, 1
        %s765 = scalar_lea.sflag [#allocation3], %s764
        %s766 = sand.u32 %s208, 1
        %s767 = smul.addr %s766, 16
        %s768 = scalar_lea.vmem [#allocation2], %s767
        // Predicated region
        $region53: #{tpu_custom_call.1} parent=51 // pred_check
          %p769 = pneg %p218
        $region54: #{tpu_custom_call.1} parent=51 // pred_check_branch
          %771 = sbr.rel (%p769) target = $region56
        $region55: #{tpu_custom_call.1} parent=51 // pred_region
          %s773 = ssub.s32 256, 256
          %774 = vsyncadd %s765, %s773
          %s775 = smul.addr %s22, 2
          %s776 = smul.addr %s775, 128
          %s777 = scalar_lea.hbm %s8, %s776
          %s778 = sshll.u32 %s768, 4
          %s779 = int_to_ptr.vmem [resolvable:$true] %s778
          %784 = dma.vmem_to_hbm [thread:$0]  %s779, 256, %s777, %s765, 128, 128, 8
        $region56: #{tpu_custom_call.1} parent=51 // pred_fallthru
          _
      $region52: #{tpu_custom_call.1} parent=5 // pred_fallthru
        _
      %p785 = scmp.le.s32.totalorder 2, %s17
      // Predicated region
      $region57: #{tpu_custom_call.1} parent=5 // pred_check
        %p786 = pneg %p785
      $region58: #{tpu_custom_call.1} parent=5 // pred_check_branch
        %788 = sbr.rel (%p786) target = $region60
      $region59: #{tpu_custom_call.1} parent=5 // pred_region
        %s789 = ssub.s32 %s17, 2
        // Predicated region
        $region61: #{tpu_custom_call.1} parent=59 // pred_check
          %p790 = pneg %p224
        $region62: #{tpu_custom_call.1} parent=59 // pred_check_branch
          %792 = sbr.rel (%p790) target = $region64
        $region63: #{tpu_custom_call.1} parent=59 // pred_region
          %s793 = sand.u32 %s209, 1
          %s794 = scalar_lea.sflag [#allocation3], %s793
          %s795 = sand.u32 %s209, 1
          %s796 = smul.addr %s795, 16
          %s797 = scalar_lea.vmem [#allocation2], %s796
          %798 = dma.done %s794, 256
        $region64: #{tpu_custom_call.1} parent=59 // pred_fallthru
          _
      $region60: #{tpu_custom_call.1} parent=5 // pred_fallthru
        _
    $region6: #{tpu_custom_call.1} parent=1 // loop_footer
      %s21 = sadd.s32 1, %s17
    $region7: #{tpu_custom_call.1} parent=1 // loop_footer_branch
      %16 = sbr.rel target = $region3
    $region8: #{tpu_custom_call.1} parent=1 // loop_exit
      _
    %799 = vsyncpa [#allocation3], 1
    %s800 = scalar_lea.sflag [#allocation3], 1
    %801 = vsyncpa %s800, 1

</llo_original>
